<compile_context>
chip_gen: v6e
topology: v6e:2x2x1
jax: 0.10.0
libtpu: 0.0.40
codegen_flags: <defaults>
</compile_context>

<pallas_src>
import functools

import jax
import jax.numpy as jnp
import numpy as np
from jax.experimental import pallas as pl
from jax.experimental.pallas import tpu as pltpu


def _dino_loss_kernel(scalars_ref, student_ref, teacher_ref, center_ref,
                      loss_ref, center_out_ref, w_ref, acc_ref, csum_ref,
                      *, ncrops, batch, tile_rows, center_momentum):
    v = pl.program_id(0)          # student crop index
    r = pl.program_id(1)          # row tile within the crop
    n_row_tiles = pl.num_programs(1)
    inv_student_temp = scalars_ref[0]
    inv_teacher_temp = scalars_ref[1]

    row0 = pl.multiple_of(r * tile_rows, tile_rows)   # tile-aligned start into w_ref

    # ---------------- v == 0 pass: streamed teacher softmax + center EMA ----------
    @pl.when(v == 0)
    def _teacher_pass():
        @pl.when(r == 0)
        def _init():
            acc_ref[...] = jnp.zeros_like(acc_ref)
            csum_ref[...] = jnp.zeros_like(csum_ref)

        center = center_ref[...].astype(jnp.float32)          # (1, D)
        t0 = teacher_ref[0].astype(jnp.float32)               # (tile_rows, D), chunk 0
        t1 = teacher_ref[1].astype(jnp.float32)               # (tile_rows, D), chunk 1

        def _row_softmax(x):
            logits = (x - center) * inv_teacher_temp
            m = jnp.max(logits, axis=-1, keepdims=True)
            e = jnp.exp(logits - m)
            return e * pl.reciprocal(jnp.sum(e, axis=-1, keepdims=True), approx=False)

        # Weight table: section 0 holds q0, section 1 holds q1 (teacher softmax).
        w_ref[0, pl.ds(row0, tile_rows), :] = _row_softmax(t0)
        w_ref[1, pl.ds(row0, tile_rows), :] = _row_softmax(t1)

        # Center EMA numerator accumulated tile-by-tile (raw, un-centered teacher).
        csum_ref[...] += (jnp.sum(t0, axis=0, keepdims=True)
                          + jnp.sum(t1, axis=0, keepdims=True))

        @pl.when(r == n_row_tiles - 1)
        def _center_out():
            batch_center = csum_ref[...] * (1.0 / (2.0 * batch))
            center_out_ref[...] = (center * center_momentum
                                   + batch_center * (1.0 - center_momentum))

    # ---------------- every step: student log-softmax + weighted accumulation -----
    s_logits = student_ref[...].astype(jnp.float32) * inv_student_temp  # (tile_rows, D)
    s_max = jnp.max(s_logits, axis=-1, keepdims=True)
    s_shift = s_logits - s_max
    s_lse = jnp.log(jnp.sum(jnp.exp(s_shift), axis=-1, keepdims=True))
    lp = s_shift - s_lse

    q0 = w_ref[0, pl.ds(row0, tile_rows), :]
    q1 = w_ref[1, pl.ds(row0, tile_rows), :]
    # Student crop 0 pairs only with teacher chunk 1; crop 1 only with chunk 0;
    # crops >= 2 pair with both.
    c_q0 = jnp.where(v == 0, 0.0, 1.0)
    c_q1 = jnp.where(v == 1, 0.0, 1.0)
    # Tile-shaped vector accumulator: pure VPU multiply-add, no per-step reduce.
    acc_ref[...] += (c_q0 * q0 + c_q1 * q1) * lp

    # ---------------- epilogue: single reduce + negate + scaling ------------------
    n_terms = 2 * (ncrops - 1)

    @pl.when(jnp.logical_and(v == pl.num_programs(0) - 1, r == n_row_tiles - 1))
    def _epilogue():
        loss_ref[0, 0] = jnp.sum(acc_ref[...]) * (-1.0 / (batch * n_terms))


def _pick_tile_rows(batch, D, itemsize, target_bytes=2 * 1024 * 1024):
    """Budget-aware row tile: ~2 MiB tiles, multiple of 8, dividing the batch."""
    t = (target_bytes // max(1, D * itemsize)) // 8 * 8
    t = int(max(8, min(t, batch)))
    while batch % t:
        t -= 8
    return t


def dino_loss_pallas(student_output, teacher_output, center, student_temp,
                     teacher_temp, *, ncrops, center_momentum):
    """Returns (loss scalar, updated center (1, D))."""
    S, D = student_output.shape
    T, _ = teacher_output.shape
    batch = T // 2
    assert T == 2 * batch and S == ncrops * batch
    assert ncrops >= 2, "DINO loss needs at least 2 crops (n_loss_terms would be 0)"
    assert batch % 8 == 0, "per-crop batch must be a multiple of 8 (sublane tiling)"

    itemsize = student_output.dtype.itemsize
    tile_rows = _pick_tile_rows(batch, D, itemsize)
    row_tiles = batch // tile_rows

    center = center.astype(jnp.float32)
    teacher3 = teacher_output.reshape(2, batch, D)      # chunk axis leading
    scalars = jnp.array([1.0 / student_temp, 1.0 / teacher_temp], dtype=jnp.float32)

    kernel = functools.partial(_dino_loss_kernel, ncrops=ncrops, batch=batch,
                               tile_rows=tile_rows, center_momentum=center_momentum)

    # Teacher block index: streams tile r during the v==0 pass, then clamps to the
    # last tile so it is never re-fetched for v >= 1.
    def teacher_map(v, r):
        return (0, jnp.minimum(v * row_tiles + r, row_tiles - 1), 0)

    # VMEM budget: weight table + double-buffered student/teacher tiles + loss
    # accumulator + softmax temporaries headroom + center buffers.
    f32 = 4
    est_bytes = (2 * batch * D * f32
                 + 2 * tile_rows * D * itemsize
                 + 4 * tile_rows * D * itemsize
                 + tile_rows * D * f32
                 + 6 * tile_rows * D * f32
                 + 8 * D * f32)
    try:
        phys_vmem = int(getattr(pltpu.get_tpu_info(), "vmem_capacity_bytes",
                                64 * 1024 * 1024))
    except Exception:  # pragma: no cover - info query not available
        phys_vmem = 64 * 1024 * 1024
    vmem_limit = int(min(max(est_bytes + est_bytes // 4, 32 * 1024 * 1024),
                         (phys_vmem * 7) // 8))

    nbytes = lambda x: x.size * x.dtype.itemsize
    cost = pl.CostEstimate(
        flops=int(8 * S * D + 12 * T * D),
        transcendentals=int(S * D + T * D),
        bytes_accessed=int(nbytes(student_output) + nbytes(teacher_output)
                           + 2 * nbytes(center) + 4),
    )

    loss, new_center = pl.pallas_call(
        kernel,
        grid=(ncrops, row_tiles),
        out_shape=(
            jax.ShapeDtypeStruct((1, 1), jnp.float32),
            jax.ShapeDtypeStruct((1, D), jnp.float32),
        ),
        in_specs=[
            pl.BlockSpec(memory_space=pltpu.MemorySpace.SMEM),                 # inv temps
            pl.BlockSpec((tile_rows, D), lambda v, r: (v * row_tiles + r, 0)),  # student
            pl.BlockSpec((2, tile_rows, D), teacher_map),                       # teacher
            pl.BlockSpec((1, D), lambda v, r: (0, 0)),                          # center
        ],
        out_specs=(
            pl.BlockSpec(memory_space=pltpu.MemorySpace.SMEM),                  # loss
            pl.BlockSpec((1, D), lambda v, r: (0, 0)),                          # new center
        ),
        scratch_shapes=[
            pltpu.VMEM((2, batch, D), jnp.float32),        # weight table: q0 | q1
            pltpu.VMEM((tile_rows, D), jnp.float32),       # vector loss accumulator
            pltpu.VMEM((1, D), jnp.float32),               # running teacher column sum
        ],
        input_output_aliases={3: 1},                       # center updated in place
        compiler_params=pltpu.CompilerParams(
            dimension_semantics=("arbitrary", "arbitrary"),
            vmem_limit_bytes=vmem_limit),
        cost_estimate=cost,
    )(scalars, student_output, teacher3, center)

    return loss[0, 0], new_center


def dino_loss_ref(student_output, teacher_output, center, student_temp,
                  teacher_temp, *, ncrops, center_momentum):
    """Pure-JAX reference mirroring the PyTorch forward."""
    batch = teacher_output.shape[0] // 2
    student_out = student_output / student_temp
    student_chunks = jnp.split(student_out, ncrops, axis=0)
    teacher_soft = jax.nn.softmax((teacher_output - center) / teacher_temp, axis=-1)
    teacher_chunks = jnp.split(teacher_soft, 2, axis=0)

    total, n_terms = 0.0, 0
    for iq, q in enumerate(teacher_chunks):
        for v in range(ncrops):
            if v == iq:
                continue
            lp = jax.nn.log_softmax(student_chunks[v], axis=-1)
            total = total + jnp.mean(jnp.sum(-q * lp, axis=-1))
            n_terms += 1
    loss = total / n_terms

    batch_center = jnp.sum(teacher_output, axis=0, keepdims=True) / teacher_output.shape[0]
    new_center = center * center_momentum + batch_center * (1 - center_momentum)
    return loss, new_center


if __name__ == "__main__":
    # Module hyperparameters (deterministic, in-script).
    out_dim = 128
    ncrops = 4
    batch = 8
    student_temp = 0.1
    center_momentum = 0.9
    warmup_teacher_temp = 0.04
    teacher_temp_final = 0.07
    warmup_teacher_temp_epochs = 3
    nepochs = 10
    epoch = 2

    # teacher_temp_schedule exactly as in __init__ (host-side numpy, like torch).
    teacher_temp_schedule = np.concatenate((
        np.linspace(warmup_teacher_temp, teacher_temp_final, warmup_teacher_temp_epochs),
        np.ones(nepochs - warmup_teacher_temp_epochs) * teacher_temp_final,
    ))
    teacher_temp = float(teacher_temp_schedule[epoch])

    key = jax.random.PRNGKey(0)
    k1, k2, k3 = jax.random.split(key, 3)
    student_output = jax.random.normal(k1, (ncrops * batch, out_dim), dtype=jnp.float32)
    teacher_output = jax.random.normal(k2, (2 * batch, out_dim), dtype=jnp.float32)
    # Buffer starts at zeros in the module; use a small nonzero value to exercise the path.
    center = 0.01 * jax.random.normal(k3, (1, out_dim), dtype=jnp.float32)

    # Reference computed first (kernel aliases the center buffer at the XLA level).
    ref_loss, ref_center = dino_loss_ref(
        student_output, teacher_output, center, student_temp, teacher_temp,
        ncrops=ncrops, center_momentum=center_momentum)

    loss, new_center = dino_loss_pallas(
        student_output, teacher_output, center, student_temp, teacher_temp,
        ncrops=ncrops, center_momentum=center_momentum)
    loss = jax.block_until_ready(loss)
    new_center = jax.block_until_ready(new_center)

    assert np.allclose(np.asarray(loss), np.asarray(ref_loss),
                       rtol=1e-5, atol=2e-5), (loss, ref_loss)
    assert np.allclose(np.asarray(new_center), np.asarray(ref_center),
                       rtol=1e-5, atol=1e-5)

    print("KERNEL_OK")
</pallas_src>

<mosaic_0001>
module attributes {stable_mosaic.version = 11 : i64} {
  func.func @_dino_loss_kernel(%arg0: i32, %arg1: i32, %arg2: memref<2xf32, #tpu.memory_space<smem>>, %arg3: memref<8x128xf32, #tpu.memory_space<vmem>>, %arg4: memref<2x8x128xf32, #tpu.memory_space<vmem>>, %arg5: memref<1x128xf32, #tpu.memory_space<vmem>>, %arg6: memref<1x1xf32, #tpu.memory_space<smem>>, %arg7: memref<1x128xf32, #tpu.memory_space<vmem>>, %arg8: memref<2x8x128xf32, #tpu.memory_space<vmem>>, %arg9: memref<8x128xf32, #tpu.memory_space<vmem>>, %arg10: memref<1x128xf32, #tpu.memory_space<vmem>>) attributes {dimension_semantics = [#tpu.dimension_semantics<arbitrary>, #tpu.dimension_semantics<arbitrary>], iteration_bounds = array<i64: 4, 1>, scalar_prefetch = 0 : i64, scratch_operands = 3 : i64, tpu.core_type = #tpu.core_type<tc>, window_params = [{transform_indices = @transform_0, window_bounds = array<i64: 2>}, {transform_indices = @transform_1, window_bounds = array<i64: 8, 128>}, {transform_indices = @transform_2, window_bounds = array<i64: 2, 8, 128>}, {pipeline_mode = #tpu.pipeline_mode<synchronous>, transform_indices = @transform_3, window_bounds = array<i64: 1, 128>}, {transform_indices = @transform_4, window_bounds = array<i64: 1, 1>}, {pipeline_mode = #tpu.pipeline_mode<synchronous>, transform_indices = @transform_5, window_bounds = array<i64: 1, 128>}]} {
    %c0 = arith.constant 0 : index
    %0 = memref.load %arg2[%c0] : memref<2xf32, #tpu.memory_space<smem>>
    %c1 = arith.constant 1 : index
    %1 = memref.load %arg2[%c1] : memref<2xf32, #tpu.memory_space<smem>>
    %c8_i32 = arith.constant 8 : i32
    %2 = arith.muli %arg1, %c8_i32 : i32
    %3 = tpu.assume_multiple %2, 8 : i32
    %c0_i32 = arith.constant 0 : i32
    %4 = arith.cmpi eq, %arg0, %c0_i32 : i32
    %5 = arith.extui %4 : i1 to i32
    %c0_i32_0 = arith.constant 0 : i32
    %6 = arith.cmpi ne, %5, %c0_i32_0 : i32
    scf.if %6 {
      %c0_i32_19 = arith.constant 0 : i32
      %44 = arith.cmpi eq, %arg1, %c0_i32_19 : i32
      %45 = arith.extui %44 : i1 to i32
      %c0_i32_20 = arith.constant 0 : i32
      %46 = arith.cmpi ne, %45, %c0_i32_20 : i32
      scf.if %46 {
        %cst_45 = arith.constant 0.000000e+00 : f32
        %99 = vector.broadcast %cst_45 : f32 to vector<8x128xf32>
        %c0_46 = arith.constant 0 : index
        %c0_47 = arith.constant 0 : index
        %100 = vector.load %arg9[%c0_46, %c0_47] : memref<8x128xf32, #tpu.memory_space<vmem>>, vector<8x128xf32>
        tpu.vector_store %arg9[%c0_46, %c0_47], %99 {strides = array<i32>} : memref<8x128xf32, #tpu.memory_space<vmem>>, vector<8x128xf32>,
        %cst_48 = arith.constant 0.000000e+00 : f32
        %101 = vector.broadcast %cst_48 : f32 to vector<1x128xf32>
        %c0_49 = arith.constant 0 : index
        %c0_50 = arith.constant 0 : index
        %102 = vector.load %arg10[%c0_49, %c0_50] : memref<1x128xf32, #tpu.memory_space<vmem>>, vector<1x128xf32>
        tpu.vector_store %arg10[%c0_49, %c0_50], %101 {strides = array<i32>} : memref<1x128xf32, #tpu.memory_space<vmem>>, vector<1x128xf32>,
      } else {
      }
      %c0_21 = arith.constant 0 : index
      %c0_22 = arith.constant 0 : index
      %47 = vector.load %arg5[%c0_21, %c0_22] : memref<1x128xf32, #tpu.memory_space<vmem>>, vector<1x128xf32>
      %c0_23 = arith.constant 0 : index
      %c0_24 = arith.constant 0 : index
      %c0_25 = arith.constant 0 : index
      %48 = vector.load %arg4[%c0_23, %c0_24, %c0_25] : memref<2x8x128xf32, #tpu.memory_space<vmem>>, vector<1x8x128xf32>
      %49 = vector.shape_cast %48 : vector<1x8x128xf32> to vector<8x128xf32>
      %c1_26 = arith.constant 1 : index
      %c0_27 = arith.constant 0 : index
      %c0_28 = arith.constant 0 : index
      %50 = vector.load %arg4[%c1_26, %c0_27, %c0_28] : memref<2x8x128xf32, #tpu.memory_space<vmem>>, vector<1x8x128xf32>
      %51 = vector.shape_cast %50 : vector<1x8x128xf32> to vector<8x128xf32>
      %52 = vector.broadcast %47 : vector<1x128xf32> to vector<8x128xf32>
      %53 = arith.subf %49, %52 : vector<8x128xf32>
      %54 = vector.broadcast %1 : f32 to vector<8x128xf32>
      %55 = arith.mulf %53, %54 : vector<8x128xf32>
      %cst_29 = arith.constant dense<0xFF800000> : vector<8xf32>
      %56 = vector.multi_reduction <maximumf>, %55, %cst_29 [1] : vector<8x128xf32> to vector<8xf32>
      %57 = vector.shape_cast %56 : vector<8xf32> to vector<8x1xf32>
      %58 = vector.broadcast %57 : vector<8x1xf32> to vector<8x128xf32>
      %59 = arith.subf %55, %58 : vector<8x128xf32>
      %60 = math.exp %59 : vector<8x128xf32>
      %cst_30 = arith.constant dense<0.000000e+00> : vector<8xf32>
      %61 = vector.multi_reduction <add>, %60, %cst_30 [1] : vector<8x128xf32> to vector<8xf32>
      %62 = vector.shape_cast %61 : vector<8xf32> to vector<8x1xf32>
      %63 = tpu.reciprocal %62 : vector<8x1xf32> -> vector<8x1xf32>
      %64 = vector.broadcast %63 : vector<8x1xf32> to vector<8x128xf32>
      %65 = arith.mulf %60, %64 : vector<8x128xf32>
      %c0_31 = arith.constant 0 : index
      %66 = arith.index_cast %3 : i32 to index
      %c0_32 = arith.constant 0 : index
      %67 = vector.load %arg8[%c0_31, %66, %c0_32] : memref<2x8x128xf32, #tpu.memory_space<vmem>>, vector<1x8x128xf32>
      %68 = vector.shape_cast %67 : vector<1x8x128xf32> to vector<8x128xf32>
      %69 = vector.shape_cast %65 : vector<8x128xf32> to vector<1x8x128xf32>
      tpu.vector_store %arg8[%c0_31, %66, %c0_32], %69 {strides = array<i32>} : memref<2x8x128xf32, #tpu.memory_space<vmem>>, vector<1x8x128xf32>,
      %70 = vector.broadcast %47 : vector<1x128xf32> to vector<8x128xf32>
      %71 = arith.subf %51, %70 : vector<8x128xf32>
      %72 = vector.broadcast %1 : f32 to vector<8x128xf32>
      %73 = arith.mulf %71, %72 : vector<8x128xf32>
      %cst_33 = arith.constant dense<0xFF800000> : vector<8xf32>
      %74 = vector.multi_reduction <maximumf>, %73, %cst_33 [1] : vector<8x128xf32> to vector<8xf32>
      %75 = vector.shape_cast %74 : vector<8xf32> to vector<8x1xf32>
      %76 = vector.broadcast %75 : vector<8x1xf32> to vector<8x128xf32>
      %77 = arith.subf %73, %76 : vector<8x128xf32>
      %78 = math.exp %77 : vector<8x128xf32>
      %cst_34 = arith.constant dense<0.000000e+00> : vector<8xf32>
      %79 = vector.multi_reduction <add>, %78, %cst_34 [1] : vector<8x128xf32> to vector<8xf32>
      %80 = vector.shape_cast %79 : vector<8xf32> to vector<8x1xf32>
      %81 = tpu.reciprocal %80 : vector<8x1xf32> -> vector<8x1xf32>
      %82 = vector.broadcast %81 : vector<8x1xf32> to vector<8x128xf32>
      %83 = arith.mulf %78, %82 : vector<8x128xf32>
      %c1_35 = arith.constant 1 : index
      %84 = arith.index_cast %3 : i32 to index
      %c0_36 = arith.constant 0 : index
      %85 = vector.load %arg8[%c1_35, %84, %c0_36] : memref<2x8x128xf32, #tpu.memory_space<vmem>>, vector<1x8x128xf32>
      %86 = vector.shape_cast %85 : vector<1x8x128xf32> to vector<8x128xf32>
      %87 = vector.shape_cast %83 : vector<8x128xf32> to vector<1x8x128xf32>
      tpu.vector_store %arg8[%c1_35, %84, %c0_36], %87 {strides = array<i32>} : memref<2x8x128xf32, #tpu.memory_space<vmem>>, vector<1x8x128xf32>,
      %c0_37 = arith.constant 0 : index
      %c0_38 = arith.constant 0 : index
      %88 = vector.load %arg10[%c0_37, %c0_38] : memref<1x128xf32, #tpu.memory_space<vmem>>, vector<1x128xf32>
      %cst_39 = arith.constant dense<0.000000e+00> : vector<128xf32>
      %89 = vector.multi_reduction <add>, %49, %cst_39 [0] : vector<8x128xf32> to vector<128xf32>
      %90 = vector.shape_cast %89 : vector<128xf32> to vector<1x128xf32>
      %cst_40 = arith.constant dense<0.000000e+00> : vector<128xf32>
      %91 = vector.multi_reduction <add>, %51, %cst_40 [0] : vector<8x128xf32> to vector<128xf32>
      %92 = vector.shape_cast %91 : vector<128xf32> to vector<1x128xf32>
      %93 = arith.addf %90, %92 : vector<1x128xf32>
      %94 = arith.addf %88, %93 : vector<1x128xf32>
      %c0_41 = arith.constant 0 : index
      %c0_42 = arith.constant 0 : index
      %95 = vector.load %arg10[%c0_41, %c0_42] : memref<1x128xf32, #tpu.memory_space<vmem>>, vector<1x128xf32>
      tpu.vector_store %arg10[%c0_41, %c0_42], %94 {strides = array<i32>} : memref<1x128xf32, #tpu.memory_space<vmem>>, vector<1x128xf32>,
      %c0_i32_43 = arith.constant 0 : i32
      %96 = arith.cmpi eq, %arg1, %c0_i32_43 : i32
      %97 = arith.extui %96 : i1 to i32
      %c0_i32_44 = arith.constant 0 : i32
      %98 = arith.cmpi ne, %97, %c0_i32_44 : i32
      scf.if %98 {
        %c0_45 = arith.constant 0 : index
        %c0_46 = arith.constant 0 : index
        %99 = vector.load %arg10[%c0_45, %c0_46] : memref<1x128xf32, #tpu.memory_space<vmem>>, vector<1x128xf32>
        %cst_47 = arith.constant 6.250000e-02 : f32
        %100 = vector.broadcast %cst_47 : f32 to vector<1x128xf32>
        %101 = arith.mulf %99, %100 : vector<1x128xf32>
        %cst_48 = arith.constant 0.899999976 : f32
        %102 = vector.broadcast %cst_48 : f32 to vector<1x128xf32>
        %103 = arith.mulf %47, %102 : vector<1x128xf32>
        %cst_49 = arith.constant 1.000000e-01 : f32
        %104 = vector.broadcast %cst_49 : f32 to vector<1x128xf32>
        %105 = arith.mulf %101, %104 : vector<1x128xf32>
        %106 = arith.addf %103, %105 : vector<1x128xf32>
        %c0_50 = arith.constant 0 : index
        %c0_51 = arith.constant 0 : index
        %107 = vector.load %arg7[%c0_50, %c0_51] : memref<1x128xf32, #tpu.memory_space<vmem>>, vector<1x128xf32>
        tpu.vector_store %arg7[%c0_50, %c0_51], %106 {strides = array<i32>} : memref<1x128xf32, #tpu.memory_space<vmem>>, vector<1x128xf32>,
      } else {
      }
    } else {
    }
    %c0_1 = arith.constant 0 : index
    %c0_2 = arith.constant 0 : index
    %7 = vector.load %arg3[%c0_1, %c0_2] : memref<8x128xf32, #tpu.memory_space<vmem>>, vector<8x128xf32>
    %8 = vector.broadcast %0 : f32 to vector<8x128xf32>
    %9 = arith.mulf %7, %8 : vector<8x128xf32>
    %cst = arith.constant dense<0xFF800000> : vector<8xf32>
    %10 = vector.multi_reduction <maximumf>, %9, %cst [1] : vector<8x128xf32> to vector<8xf32>
    %11 = vector.shape_cast %10 : vector<8xf32> to vector<8x1xf32>
    %12 = vector.broadcast %11 : vector<8x1xf32> to vector<8x128xf32>
    %13 = arith.subf %9, %12 : vector<8x128xf32>
    %14 = math.exp %13 : vector<8x128xf32>
    %cst_3 = arith.constant dense<0.000000e+00> : vector<8xf32>
    %15 = vector.multi_reduction <add>, %14, %cst_3 [1] : vector<8x128xf32> to vector<8xf32>
    %16 = vector.shape_cast %15 : vector<8xf32> to vector<8x1xf32>
    %17 = math.log %16 : vector<8x1xf32>
    %18 = vector.broadcast %17 : vector<8x1xf32> to vector<8x128xf32>
    %19 = arith.subf %13, %18 : vector<8x128xf32>
    %c0_4 = arith.constant 0 : index
    %20 = arith.index_cast %3 : i32 to index
    %c0_5 = arith.constant 0 : index
    %21 = vector.load %arg8[%c0_4, %20, %c0_5] : memref<2x8x128xf32, #tpu.memory_space<vmem>>, vector<1x8x128xf32>
    %22 = vector.shape_cast %21 : vector<1x8x128xf32> to vector<8x128xf32>
    %c1_6 = arith.constant 1 : index
    %23 = arith.index_cast %3 : i32 to index
    %c0_7 = arith.constant 0 : index
    %24 = vector.load %arg8[%c1_6, %23, %c0_7] : memref<2x8x128xf32, #tpu.memory_space<vmem>>, vector<1x8x128xf32>
    %25 = vector.shape_cast %24 : vector<1x8x128xf32> to vector<8x128xf32>
    %c0_i32_8 = arith.constant 0 : i32
    %26 = arith.cmpi eq, %arg0, %c0_i32_8 : i32
    %cst_9 = arith.constant 0.000000e+00 : f32
    %cst_10 = arith.constant 1.000000e+00 : f32
    %27 = arith.select %26, %cst_9, %cst_10 : f32
    %c1_i32 = arith.constant 1 : i32
    %28 = arith.cmpi eq, %arg0, %c1_i32 : i32
    %cst_11 = arith.constant 0.000000e+00 : f32
    %cst_12 = arith.constant 1.000000e+00 : f32
    %29 = arith.select %28, %cst_11, %cst_12 : f32
    %c0_13 = arith.constant 0 : index
    %c0_14 = arith.constant 0 : index
    %30 = vector.load %arg9[%c0_13, %c0_14] : memref<8x128xf32, #tpu.memory_space<vmem>>, vector<8x128xf32>
    %31 = vector.broadcast %27 : f32 to vector<8x128xf32>
    %32 = arith.mulf %31, %22 : vector<8x128xf32>
    %33 = vector.broadcast %29 : f32 to vector<8x128xf32>
    %34 = arith.mulf %33, %25 : vector<8x128xf32>
    %35 = arith.addf %32, %34 : vector<8x128xf32>
    %36 = arith.mulf %35, %19 : vector<8x128xf32>
    %37 = arith.addf %30, %36 : vector<8x128xf32>
    %c0_15 = arith.constant 0 : index
    %c0_16 = arith.constant 0 : index
    %38 = vector.load %arg9[%c0_15, %c0_16] : memref<8x128xf32, #tpu.memory_space<vmem>>, vector<8x128xf32>
    tpu.vector_store %arg9[%c0_15, %c0_16], %37 {strides = array<i32>} : memref<8x128xf32, #tpu.memory_space<vmem>>, vector<8x128xf32>,
    %c3_i32 = arith.constant 3 : i32
    %39 = arith.cmpi eq, %arg0, %c3_i32 : i32
    %c0_i32_17 = arith.constant 0 : i32
    %40 = arith.cmpi eq, %arg1, %c0_i32_17 : i32
    %41 = arith.andi %39, %40 : i1
    %42 = arith.extui %41 : i1 to i32
    %c0_i32_18 = arith.constant 0 : i32
    %43 = arith.cmpi ne, %42, %c0_i32_18 : i32
    scf.if %43 {
      %c0_19 = arith.constant 0 : index
      %c0_20 = arith.constant 0 : index
      %44 = vector.load %arg9[%c0_19, %c0_20] : memref<8x128xf32, #tpu.memory_space<vmem>>, vector<8x128xf32>
      %45 = vector.shape_cast %44 : vector<8x128xf32> to vector<1x8x128xf32>
      %cst_21 = arith.constant dense<0.000000e+00> : vector<1xf32>
      %46 = vector.multi_reduction <add>, %45, %cst_21 [1, 2] : vector<1x8x128xf32> to vector<1xf32>
      %47 = vector.shape_cast %46 : vector<1xf32> to vector<1x1x1xf32>
      %48 = vector.extract %47[0, 0, 0] : f32 from vector<1x1x1xf32>
      %cst_22 = arith.constant -0.020833334 : f32
      %49 = arith.mulf %48, %cst_22 : f32
      %c0_23 = arith.constant 0 : index
      %c0_24 = arith.constant 0 : index
      %50 = memref.load %arg6[%c0_23, %c0_24] : memref<1x1xf32, #tpu.memory_space<smem>>
      memref.store %49, %arg6[%c0_23, %c0_24] : memref<1x1xf32, #tpu.memory_space<smem>>
    } else {
    }
    return
  }
  func.func @transform_0(%arg0: i32, %arg1: i32) -> i32 {
    %c0_i32 = arith.constant 0 : i32
    %c0_i32_0 = arith.constant 0 : i32
    return %c0_i32 : i32
  }
  func.func @transform_1(%arg0: i32, %arg1: i32) -> (i32, i32) {
    %c1_i32 = arith.constant 1 : i32
    %0 = arith.muli %arg0, %c1_i32 : i32
    %1 = arith.addi %0, %arg1 : i32
    %c0_i32 = arith.constant 0 : i32
    %c0_i32_0 = arith.constant 0 : i32
    return %1, %c0_i32 : i32, i32
  }
  func.func @transform_2(%arg0: i32, %arg1: i32) -> (i32, i32, i32) {
    %c1_i32 = arith.constant 1 : i32
    %0 = arith.muli %arg0, %c1_i32 : i32
    %1 = arith.addi %0, %arg1 : i32
    %c0_i32 = arith.constant 0 : i32
    %2 = arith.minsi %1, %c0_i32 : i32
    %c0_i32_0 = arith.constant 0 : i32
    %c0_i32_1 = arith.constant 0 : i32
    %c0_i32_2 = arith.constant 0 : i32
    return %c0_i32_0, %2, %c0_i32_1 : i32, i32, i32
  }
  func.func @transform_3(%arg0: i32, %arg1: i32) -> (i32, i32) {
    %c0_i32 = arith.constant 0 : i32
    %c0_i32_0 = arith.constant 0 : i32
    %c0_i32_1 = arith.constant 0 : i32
    return %c0_i32, %c0_i32_0 : i32, i32
  }
  func.func @transform_4(%arg0: i32, %arg1: i32) -> (i32, i32) {
    %c0_i32 = arith.constant 0 : i32
    %c0_i32_0 = arith.constant 0 : i32
    %c0_i32_1 = arith.constant 0 : i32
    return %c0_i32, %c0_i32_0 : i32, i32
  }
  func.func @transform_5(%arg0: i32, %arg1: i32) -> (i32, i32) {
    %c0_i32 = arith.constant 0 : i32
    %c0_i32_0 = arith.constant 0 : i32
    %c0_i32_1 = arith.constant 0 : i32
    return %c0_i32, %c0_i32_0 : i32, i32
  }
}

</mosaic_0001>

<llo_original>
// kernel: tpu_custom_call.1
$region0: #{tpu_custom_call.1}
  #allocation0 [shape = 'u32[]', space=smem, size = 0x4, offset = 0x4, fixed_abs, tag = 'smem constant byte address 0x4 - core index']
  #allocation1 [shape = 'u32[144,128]{1,0:T(1,128)}', space=vmem, size = 0x12000, scoped, tag = 'internal scratch']
  #allocation2 [shape = 'f32[2,8,128]{2,1,0:T(8,128)}', space=vmem, size = 0x2000, scoped, tag = 'scratch operand']
  #allocation3 [shape = 'f32[8,128]{1,0:T(8,128)}', space=vmem, size = 0x1000, scoped, tag = 'scratch operand']
  #allocation4 [shape = 'f32[1,128]{1,0:T(1,128)}', space=vmem, size = 0x200, scoped, tag = 'scratch operand']
  %s0 = inlined_call_operand.vmem [shape: f32[2], index: 0, kind: input, shape index: {}]
  %s1 = inlined_call_operand.hbm [shape: f32[32,128], index: 1, kind: input, shape index: {}]
  %s2 = inlined_call_operand.hbm [shape: f32[2,8,128], index: 2, kind: input, shape index: {}]
  %s3 = inlined_call_operand.hbm [shape: f32[1,128], index: 3, kind: input, shape index: {}, may-alias: {3,5}]
  %s4 = inlined_call_operand.hbm [shape: f32[1,1], index: 4, kind: output, shape index: {0}]
  %s5 = inlined_call_operand.hbm [shape: f32[1,128], index: 5, kind: output, shape index: {1}, may-alias: {3,5}]
  %6 = xla_tuple %s4, %s5
  %s7 = sld [smem:[#allocation0]]
  $region89: #{tpu_custom_call.1} parent=0
    _
  %s9 = ssub.s32 1, %s7
  %s10 = scalar_select 0, %s9, %s7
  $region1: #{tpu_custom_call.1} parent=0
    #allocation5 [shape = 'u8[512]{0}', space=smem, size = 0x200, scoped, tag = 'input window, operand 0, single buffered']
    #allocation6 [shape = 's32[2]{0}', space=sflag, size = 0x8, scoped, tag = 'scoped memory for tpu_custom_call.1']
    #allocation7 [shape = 's32[2]{0}', space=sflag, size = 0x8, scoped, tag = 'scoped memory for tpu_custom_call.1']
    #allocation8 [shape = 's32[2]{0}', space=sflag, size = 0x8, scoped, tag = 'scoped memory for tpu_custom_call.1']
    #allocation9 [shape = 's32[2]{0}', space=sflag, size = 0x8, scoped, tag = 'scoped memory for tpu_custom_call.1']
    #allocation10 [shape = 'u8[8192]{0}', space=vmem, size = 0x2000, scoped, tag = 'input window, operand 1']
    #allocation11 [shape = 'u8[16384]{0}', space=vmem, size = 0x4000, scoped, tag = 'input window, operand 2']
    #allocation12 [shape = 's32[2]{0}', space=sflag, size = 0x8, scoped, tag = 'scoped memory for tpu_custom_call.1']
    #allocation13 [shape = 'u8[512]{0}', space=vmem, size = 0x400, scoped, tag = 'input window, operand 3, single buffered']
    #allocation14 [shape = 'u8[512]{0}', space=smem, size = 0x200, scoped, tag = 'output window, operand 0, single buffered']
    #allocation15 [shape = 'u8[512]{0}', space=vmem, size = 0x400, scoped, tag = 'output window, operand 1, single buffered']
    %11 = vsyncpa [#allocation9], 0
    %12 = vsyncpa [#allocation6], 0
    %s13 = scalar_lea.sflag [#allocation6], 1
    %14 = vsyncpa %s13, 0
    %15 = vsyncpa [#allocation12], 0
    %s16 = scalar_lea.sflag [#allocation12], 1
    %17 = vsyncpa %s16, 0
    %18 = vsyncpa [#allocation8], 0
    %19 = vsyncpa [#allocation7], 0
    loop: start=0, step=1, limit=6
    $region2: #{tpu_custom_call.1} parent=1 // loop_pre_header
      _
    $region3: #{tpu_custom_call.1} parent=1 // loop_header
      %s21 = sphi 0, %s25
      %p22 = scmp.ge.s32.totalorder %s21, 6
      %s28 = sphi 0, %s40
      %s29 = sphi 0, %s36
      %s30 = sphi 0, %s28
      %s31 = sphi 0, %s29
      %s32 = sphi 0, %s30
      %s33 = sphi 0, %s31
      %s41 = sphi 0, %s41
      %s43 = sphi 0, %s41
      %s44 = sphi 0, %s43
      %s58 = sphi 0, %s44
      %s66 = sphi 0, %s68
      %s69 = sphi 0, %s66
      %s70 = sphi 0, %s69
      %s86 = sphi 0, %s70
      %s98 = sphi 0, %s100
      %s101 = sphi 0, %s98
      %s102 = sphi 0, %s101
      %s118 = sphi 0, %s102
      %s122 = sphi 0, %s122
      %s124 = sphi 0, %s122
      %s125 = sphi 0, %s124
      %s139 = sphi 0, %s125
      %s143 = sphi 0, %s143
      %s145 = sphi 0, %s143
      %s146 = sphi 0, %s145
      %s160 = sphi 0, %s146
      %s164 = sphi 0, %s164
      %s166 = sphi 0, %s164
      %s167 = sphi 0, %s166
      %s181 = sphi 0, %s167
    $region4: #{tpu_custom_call.1} parent=1 // loop_header_branch
      %24 = sbr.rel (%p22) target = $region8
    $region5: #{tpu_custom_call.1} parent=1 // loop_body
      %s26 = ssub.s32 %s21, 1
      %s27 = ssub.s32 %s21, 2
      %s34 = sadd.s32 1, %s29
      %p35 = scmp.ge.s32.totalorder %s34, 1
      %s36 = scalar_select %p35, 0, %s34
      %s37 = sadd.s32 1, %s28
      %s38 = scalar_select %p35, %s37, %s28
      %p39 = scmp.ge.s32.totalorder %s38, 4
      %s40 = scalar_select %p39, 0, %s38
      %s42 = sadd.s32 %s41, 1
      %p45 = scmp.eq.s32.totalorder %s21, 3
      %p46 = scmp.ne.s32.totalorder %s41, %s43
      %p47 = scmp.eq.s32.totalorder %s21, 0
      %p48 = por %p46, %p47
      %p49 = scmp.ne.s32.totalorder %s41, %s43
      %p50 = scmp.eq.s32.totalorder %s26, 3
      %p51 = por %p49, %p50
      %p52 = scmp.ne.s32.totalorder %s43, %s44
      %p53 = scmp.eq.s32.totalorder %s26, 0
      %p54 = por %p52, %p53
      %p55 = scmp.ne.s32.totalorder %s43, %s44
      %p56 = scmp.eq.s32.totalorder %s27, 3
      %p57 = por %p55, %p56
      %p59 = scmp.ne.s32.totalorder %s44, %s58
      %p60 = scmp.eq.s32.totalorder %s27, 0
      %p61 = por %p59, %p60
      %s62 = sadd.s32 %s28, %s29
      %s63 = sadd.s32 %s40, %s36
      %s64 = ssub.s32 %s62, %s63
      %p65 = scmp.eq.s32.totalorder %s64, 0
      %s67 = sadd.s32 %s66, 1
      %s68 = scalar_select %p65, %s66, %s67
      %p71 = pneg %p65
      %p72 = scmp.eq.s32.totalorder %s21, 3
      %p73 = por %p71, %p72
      %p74 = scmp.ne.s32.totalorder %s66, %s69
      %p75 = scmp.eq.s32.totalorder %s21, 0
      %p76 = por %p74, %p75
      %p77 = scmp.ne.s32.totalorder %s66, %s69
      %p78 = scmp.eq.s32.totalorder %s26, 3
      %p79 = por %p77, %p78
      %p80 = scmp.ne.s32.totalorder %s69, %s70
      %p81 = scmp.eq.s32.totalorder %s26, 0
      %p82 = por %p80, %p81
      %p83 = scmp.ne.s32.totalorder %s69, %s70
      %p84 = scmp.eq.s32.totalorder %s27, 3
      %p85 = por %p83, %p84
      %p87 = scmp.ne.s32.totalorder %s70, %s86
      %p88 = scmp.eq.s32.totalorder %s27, 0
      %p89 = por %p87, %p88
      %s90 = sadd.s32 %s28, %s29
      %p91 = scmp.lt.s32.totalorder %s90, 0
      %s92 = scalar_select %p91, %s90, 0
      %s93 = sadd.s32 %s40, %s36
      %p94 = scmp.lt.s32.totalorder %s93, 0
      %s95 = scalar_select %p94, %s93, 0
      %s96 = ssub.s32 %s92, %s95
      %p97 = scmp.eq.s32.totalorder %s96, 0
      %s99 = sadd.s32 %s98, 1
      %s100 = scalar_select %p97, %s98, %s99
      %p103 = pneg %p97
      %p104 = scmp.eq.s32.totalorder %s21, 3
      %p105 = por %p103, %p104
      %p106 = scmp.ne.s32.totalorder %s98, %s101
      %p107 = scmp.eq.s32.totalorder %s21, 0
      %p108 = por %p106, %p107
      %p109 = scmp.ne.s32.totalorder %s98, %s101
      %p110 = scmp.eq.s32.totalorder %s26, 3
      %p111 = por %p109, %p110
      %p112 = scmp.ne.s32.totalorder %s101, %s102
      %p113 = scmp.eq.s32.totalorder %s26, 0
      %p114 = por %p112, %p113
      %p115 = scmp.ne.s32.totalorder %s101, %s102
      %p116 = scmp.eq.s32.totalorder %s27, 3
      %p117 = por %p115, %p116
      %p119 = scmp.ne.s32.totalorder %s102, %s118
      %p120 = scmp.eq.s32.totalorder %s27, 0
      %p121 = por %p119, %p120
      %s123 = sadd.s32 %s122, 1
      %p126 = scmp.eq.s32.totalorder %s21, 3
      %p127 = scmp.ne.s32.totalorder %s122, %s124
      %p128 = scmp.eq.s32.totalorder %s21, 0
      %p129 = por %p127, %p128
      %p130 = scmp.ne.s32.totalorder %s122, %s124
      %p131 = scmp.eq.s32.totalorder %s26, 3
      %p132 = por %p130, %p131
      %p133 = scmp.ne.s32.totalorder %s124, %s125
      %p134 = scmp.eq.s32.totalorder %s26, 0
      %p135 = por %p133, %p134
      %p136 = scmp.ne.s32.totalorder %s124, %s125
      %p137 = scmp.eq.s32.totalorder %s27, 3
      %p138 = por %p136, %p137
      %p140 = scmp.ne.s32.totalorder %s125, %s139
      %p141 = scmp.eq.s32.totalorder %s27, 0
      %p142 = por %p140, %p141
      %s144 = sadd.s32 %s143, 1
      %p147 = scmp.eq.s32.totalorder %s21, 3
      %p148 = scmp.ne.s32.totalorder %s143, %s145
      %p149 = scmp.eq.s32.totalorder %s21, 0
      %p150 = por %p148, %p149
      %p151 = scmp.ne.s32.totalorder %s143, %s145
      %p152 = scmp.eq.s32.totalorder %s26, 3
      %p153 = por %p151, %p152
      %p154 = scmp.ne.s32.totalorder %s145, %s146
      %p155 = scmp.eq.s32.totalorder %s26, 0
      %p156 = por %p154, %p155
      %p157 = scmp.ne.s32.totalorder %s145, %s146
      %p158 = scmp.eq.s32.totalorder %s27, 3
      %p159 = por %p157, %p158
      %p161 = scmp.ne.s32.totalorder %s146, %s160
      %p162 = scmp.eq.s32.totalorder %s27, 0
      %p163 = por %p161, %p162
      %s165 = sadd.s32 %s164, 1
      %p168 = scmp.eq.s32.totalorder %s21, 3
      %p169 = scmp.ne.s32.totalorder %s164, %s166
      %p170 = scmp.eq.s32.totalorder %s21, 0
      %p171 = por %p169, %p170
      %p172 = scmp.ne.s32.totalorder %s164, %s166
      %p173 = scmp.eq.s32.totalorder %s26, 3
      %p174 = por %p172, %p173
      %p175 = scmp.ne.s32.totalorder %s166, %s167
      %p176 = scmp.eq.s32.totalorder %s26, 0
      %p177 = por %p175, %p176
      %p178 = scmp.ne.s32.totalorder %s166, %s167
      %p179 = scmp.eq.s32.totalorder %s27, 3
      %p180 = por %p178, %p179
      %p182 = scmp.ne.s32.totalorder %s167, %s181
      %p183 = scmp.eq.s32.totalorder %s27, 0
      %p184 = por %p182, %p183
      %p185 = scmp.le.s32.totalorder 1, %s21
      %p186 = scmp.lt.s32.totalorder %s21, 5
      %p187 = pnand %p185, %p186
      %p188 = pneg %p187
      // Predicated region
      $region9: #{tpu_custom_call.1} parent=5 // pred_check
        _
      $region10: #{tpu_custom_call.1} parent=5 // pred_check_branch
        %190 = sbr.rel (%p187) target = $region12
      $region11: #{tpu_custom_call.1} parent=5 // pred_region
        %s191 = ssub.s32 %s21, 1
        // Predicated region
        $region13: #{tpu_custom_call.1} parent=11 // pred_check
          %p192 = pneg %p54
        $region14: #{tpu_custom_call.1} parent=11 // pred_check_branch
          %194 = sbr.rel (%p192) target = $region16
        $region15: #{tpu_custom_call.1} parent=11 // pred_region
          %s196 = ssub.s32 16, 16
          %197 = vsyncadd [#allocation9], %s196
          %s199 = sshll.u32 %s0, 4
          %s200 = int_to_ptr.vmem [resolvable:$true] %s199
          %202 = dma.vmem_to_smem %s200, 16, [#allocation5], [#allocation9]
        $region16: #{tpu_custom_call.1} parent=11 // pred_fallthru
          _
        // Predicated region
        $region17: #{tpu_custom_call.1} parent=11 // pred_check
          %p203 = pneg %p135
        $region18: #{tpu_custom_call.1} parent=11 // pred_check_branch
          %205 = sbr.rel (%p203) target = $region20
        $region19: #{tpu_custom_call.1} parent=11 // pred_region
          %s207 = ssub.s32 16, 16
          %208 = vsyncadd [#allocation12], %s207
          %s210 = sshll.u32 [#allocation13], 4
          %s211 = int_to_ptr.vmem [resolvable:$true] %s210
          %213 = dma.hbm_to_vmem [thread:$0]  %s3, 16, %s211, [#allocation12]
        $region20: #{tpu_custom_call.1} parent=11 // pred_fallthru
          _
      $region12: #{tpu_custom_call.1} parent=5 // pred_fallthru
        _
      %p214 = scmp.lt.s32.totalorder %s21, 4
      // Predicated region
      $region21: #{tpu_custom_call.1} parent=5 // pred_check
        %p215 = pneg %p214
      $region22: #{tpu_custom_call.1} parent=5 // pred_check_branch
        %217 = sbr.rel (%p215) target = $region24
      $region23: #{tpu_custom_call.1} parent=5 // pred_region
        // Predicated region
        $region25: #{tpu_custom_call.1} parent=23 // pred_check
          %p218 = pneg %p76
        $region26: #{tpu_custom_call.1} parent=23 // pred_check_branch
          %220 = sbr.rel (%p218) target = $region28
        $region27: #{tpu_custom_call.1} parent=23 // pred_region
          %s221 = sand.u32 %s66, 1
          %s222 = scalar_lea.sflag [#allocation6], %s221
          %s223 = sand.u32 %s66, 1
          %s224 = smul.addr %s223, 8
          %s225 = scalar_lea.vmem [#allocation10], %s224
          %s226 = sadd.s32 %s28, %s29
          %s228 = ssub.s32 128, 128
          %229 = vsyncadd %s222, %s228
          %s230 = smul.addr %s226, 128
          %s231 = scalar_lea.hbm %s1, %s230
          %s233 = sshll.u32 %s225, 4
          %s234 = int_to_ptr.vmem [resolvable:$true] %s233
          %236 = dma.hbm_to_vmem [thread:$0]  %s231, 128, %s234, %s222
        $region28: #{tpu_custom_call.1} parent=23 // pred_fallthru
          _
        // Predicated region
        $region29: #{tpu_custom_call.1} parent=23 // pred_check
          %p237 = pneg %p108
        $region30: #{tpu_custom_call.1} parent=23 // pred_check_branch
          %239 = sbr.rel (%p237) target = $region32
        $region31: #{tpu_custom_call.1} parent=23 // pred_region
          %s240 = sand.u32 %s21, 1
          %s241 = scalar_lea.sflag [#allocation12], %s240
          %s242 = sand.u32 %s98, 1
          %s243 = smul.addr %s242, 16
          %s244 = scalar_lea.vmem [#allocation11], %s243
          %s245 = sadd.s32 %s28, %s29
          %p246 = scmp.lt.s32.totalorder %s245, 0
          %s247 = scalar_select %p246, %s245, 0
          %s249 = ssub.s32 256, 256
          %250 = vsyncadd %s241, %s249
          %s251 = smul.addr %s247, 128
          %s252 = scalar_lea.hbm %s2, %s251
          %s253 = sshll.u32 %s244, 4
          %s254 = int_to_ptr.vmem [resolvable:$true] %s253
          %259 = dma.hbm_to_vmem [thread:$0]  %s252, 256, %s254, %s241, 128, 128, 8
        $region32: #{tpu_custom_call.1} parent=23 // pred_fallthru
          _
      $region24: #{tpu_custom_call.1} parent=5 // pred_fallthru
        _
      %p260 = scmp.le.s32.totalorder 1, %s21
      %p261 = scmp.lt.s32.totalorder %s21, 5
      %p262 = pnand %p260, %p261
      %p263 = pneg %p262
      // Predicated region
      $region33: #{tpu_custom_call.1} parent=5 // pred_check
        _
      $region34: #{tpu_custom_call.1} parent=5 // pred_check_branch
        %265 = sbr.rel (%p262) target = $region36
      $region35: #{tpu_custom_call.1} parent=5 // pred_region
        %s266 = ssub.s32 %s21, 1
        // Predicated region
        $region37: #{tpu_custom_call.1} parent=35 // pred_check
          %p267 = pneg %p54
        $region38: #{tpu_custom_call.1} parent=35 // pred_check_branch
          %269 = sbr.rel (%p267) target = $region40
        $region39: #{tpu_custom_call.1} parent=35 // pred_region
          %270 = dma.done [#allocation9], 16
        $region40: #{tpu_custom_call.1} parent=35 // pred_fallthru
          _
        %s271 = sand.u32 %s69, 1
        %s272 = scalar_lea.sflag [#allocation6], %s271
        %s273 = sand.u32 %s69, 1
        %s274 = smul.addr %s273, 8
        %s275 = scalar_lea.vmem [#allocation10], %s274
        // Predicated region
        $region41: #{tpu_custom_call.1} parent=35 // pred_check
          %p276 = pneg %p82
        $region42: #{tpu_custom_call.1} parent=35 // pred_check_branch
          %278 = sbr.rel (%p276) target = $region44
        $region43: #{tpu_custom_call.1} parent=35 // pred_region
          %279 = dma.done %s272, 128
        $region44: #{tpu_custom_call.1} parent=35 // pred_fallthru
          _
        %s280 = sand.u32 %s26, 1
        %s281 = scalar_lea.sflag [#allocation12], %s280
        %s282 = sand.u32 %s101, 1
        %s283 = smul.addr %s282, 16
        %s284 = scalar_lea.vmem [#allocation11], %s283
        // Predicated region
        $region45: #{tpu_custom_call.1} parent=35 // pred_check
          %p285 = pneg %p114
        $region46: #{tpu_custom_call.1} parent=35 // pred_check_branch
          %287 = sbr.rel (%p285) target = $region48
        $region47: #{tpu_custom_call.1} parent=35 // pred_region
          %288 = dma.done %s281, 256
        $region48: #{tpu_custom_call.1} parent=35 // pred_fallthru
          _
        // Predicated region
        $region49: #{tpu_custom_call.1} parent=35 // pred_check
          %p289 = pneg %p135
        $region50: #{tpu_custom_call.1} parent=35 // pred_check_branch
          %291 = sbr.rel (%p289) target = $region52
        $region51: #{tpu_custom_call.1} parent=35 // pred_region
          %292 = dma.done [#allocation12], 16
        $region52: #{tpu_custom_call.1} parent=35 // pred_fallthru
          _
        %293 = sfence
        %p294 = pneg %p54
        %p295 = pneg %p51
        %s296 = sand.u32 %s69, 1
        %s297 = scalar_lea.sflag [#allocation6], %s296
        %s298 = sand.u32 %s69, 1
        %s299 = smul.addr %s298, 8
        %s300 = scalar_lea.vmem [#allocation10], %s299
        %p301 = pneg %p82
        %p302 = pneg %p79
        %s303 = sand.u32 %s26, 1
        %s304 = scalar_lea.sflag [#allocation12], %s303
        %s305 = sand.u32 %s101, 1
        %s306 = smul.addr %s305, 16
        %s307 = scalar_lea.vmem [#allocation11], %s306
        %p308 = pneg %p114
        %p309 = pneg %p111
        %p310 = pneg %p135
        %p311 = pneg %p132
        %p312 = pneg %p156
        %p313 = pneg %p153
        %p314 = pneg %p177
        %p315 = pneg %p174
        %s316 = sadd.s32 %s30, %s31
        %s317 = sadd.s32 %s30, %s31
        %p318 = scmp.lt.s32.totalorder %s317, 0
        %s319 = scalar_select %p318, %s317, 0
        %s320 = sld [smem:[#allocation5]]
        %s321 = sld [smem:[#allocation5 + $0x1]]
        %s322 = smul.u32 %s31, 8
        %p323 = scmp.eq.s32.totalorder %s30, 0
        // Predicated region
        $region53: #{tpu_custom_call.1} parent=35 // pred_check
          %p324 = pneg %p323
        $region54: #{tpu_custom_call.1} parent=35 // pred_check_branch
          %326 = sbr.rel (%p324) target = $region56
        $region55: #{tpu_custom_call.1} parent=35 // pred_region
          %p327 = scmp.eq.s32.totalorder %s31, 0
          // Predicated region
          $region57: #{tpu_custom_call.1} parent=55 // pred_check
            %p328 = pneg %p327
          $region58: #{tpu_custom_call.1} parent=55 // pred_check_branch
            %330 = sbr.rel (%p328) target = $region60
          $region59: #{tpu_custom_call.1} parent=55 // pred_region
            %331 = vst [vmem:[#allocation3] sm:$0xff] 0.0
            %332 = vst [vmem:[#allocation4] sm:$0x1] 0.0
          $region60: #{tpu_custom_call.1} parent=55 // pred_fallthru
            _
          %v333 = vld [vmem:[#allocation13] sm:$0x1]
          %v334 = vld [vmem:[%s284] sm:$0xff]
          %s335 = scalar_lea.vmem %s284, 8 [#allocation11]
          %v336 = vld [vmem:[%s335] sm:$0xff]
          %v338 = vlaneseq
          %v339 = vshrl.u32 %v338, 7
          %v340 = vsub.s32 0, %v339
          %v341 = vrot.slane %v333, %v340
          %v343 = vsub.f32 %v334, %v341
          %v344 = vstv %s321
          %v345 = vmul.f32 %v343, %v344
          %346 = vmax.xlane.f32.xlu0 %v345
          %v347 = vpop.xlane.xlu0 %346
          %v348 = vsub.f32 %v345, %v347
          %v349 = vmul.f32 %v348, 1.442695
          %v350 = vpow.pop %v349
          %351 = vadd.xlane.f32.xlu0 %v350
          %v352 = vpop.xlane.xlu0 %351
          %v353 = vrcp.pop %v352
          %v354 = vmul.f32 %v350, %v353
          %s355 = scalar_lea.vmem [#allocation2], %s322
          %356 = vst [vmem:[%s355] sm:$0xff] %v354
          %v357 = vsub.f32 %v336, %v341
          %v358 = vmul.f32 %v357, %v344
          %359 = vmax.xlane.f32.xlu0 %v358
          %v360 = vpop.xlane.xlu0 %359
          %v361 = vsub.f32 %v358, %v360
          %v362 = vmul.f32 %v361, 1.442695
          %v363 = vpow.pop %v362
          %364 = vadd.xlane.f32.xlu0 %v363
          %v365 = vpop.xlane.xlu0 %364
          %v366 = vrcp.pop %v365
          %v367 = vmul.f32 %v363, %v366
          %s368 = sadd.s32 %s322, 8
          %s369 = scalar_lea.vmem [#allocation2], %s368
          %370 = vst [vmem:[%s369] sm:$0xff] %v367
          %v371 = vld [vmem:[#allocation4] sm:$0x1]
          %v372 = vrot.slane %v334, 4
          %v373 = vadd.f32 %v334, %v372
          %v374 = vrot.slane %v373, 2
          %v375 = vadd.f32 %v373, %v374
          %v376 = vrot.slane %v375, 1
          %v377 = vadd.f32 %v375, %v376
          %v378 = vrot.slane %v336, 4
          %v379 = vadd.f32 %v336, %v378
          %v380 = vrot.slane %v379, 2
          %v381 = vadd.f32 %v379, %v380
          %v382 = vrot.slane %v381, 1
          %v383 = vadd.f32 %v381, %v382
          %v384 = vadd.f32 %v377, %v383
          %v385 = vadd.f32 %v371, %v384
          %386 = vst [vmem:[#allocation4] sm:$0x1] %v385
          // Predicated region
          $region61: #{tpu_custom_call.1} parent=55 // pred_check
            %p387 = pneg %p327
          $region62: #{tpu_custom_call.1} parent=55 // pred_check_branch
            %389 = sbr.rel (%p387) target = $region64
          $region63: #{tpu_custom_call.1} parent=55 // pred_region
            %v390 = vld [vmem:[#allocation4] sm:$0x1]
            %v391 = vmul.f32 %v390, 0.0625
            %v392 = vmul.f32 %v333, 0.9
            %v393 = vmul.f32 %v391, 0.1
            %v394 = vadd.f32 %v392, %v393
            %395 = vst [vmem:[#allocation15] sm:$0x1] %v394
          $region64: #{tpu_custom_call.1} parent=55 // pred_fallthru
            _
        $region56: #{tpu_custom_call.1} parent=35 // pred_fallthru
          _
        %v396 = vld [vmem:[%s275] sm:$0xff]
        %v397 = vstv %s320
        %v398 = vmul.f32 %v396, %v397
        %399 = vmax.xlane.f32.xlu0 %v398
        %v400 = vpop.xlane.xlu0 %399
        %v401 = vsub.f32 %v398, %v400
        %v402 = vmul.f32 %v401, 1.442695
        %v403 = vpow.pop %v402
        %404 = vadd.xlane.f32.xlu0 %v403
        %v405 = vpop.xlane.xlu0 %404
        %v406 = vlog2.pop %v405
        %v407 = vmul.f32 %v406, 0.6931472
        %v408 = vsub.f32 %v401, %v407
        %s409 = scalar_lea.vmem [#allocation2], %s322
        %v410 = vld [vmem:[%s409] sm:$0xff]
        %s411 = sadd.s32 %s322, 8
        %s412 = scalar_lea.vmem [#allocation2], %s411
        %v413 = vld [vmem:[%s412] sm:$0xff]
        %s414 = scalar_select %p323, 0.0, 1.0
        %p415 = scmp.eq.s32.totalorder %s30, 1
        %s416 = scalar_select %p415, 0.0, 1.0
        %v417 = vld [vmem:[#allocation3] sm:$0xff]
        %v418 = vstv %s414
        %v419 = vmul.f32 %v418, %v410
        %v420 = vstv %s416
        %v421 = vmul.f32 %v420, %v413
        %v422 = vadd.f32 %v419, %v421
        %v423 = vmul.f32 %v422, %v408
        %v424 = vadd.f32 %v417, %v423
        %425 = vst [vmem:[#allocation3] sm:$0xff] %v424
        %p426 = scmp.eq.s32.totalorder %s30, 3
        %p427 = scmp.eq.s32.totalorder %s31, 0
        %p428 = pnand %p426, %p427
        %p429 = pneg %p428
        // Predicated region
        $region65: #{tpu_custom_call.1} parent=35 // pred_check
          _
        $region66: #{tpu_custom_call.1} parent=35 // pred_check_branch
          %431 = sbr.rel (%p428) target = $region68
        $region67: #{tpu_custom_call.1} parent=35 // pred_region
          %v432 = vld [vmem:[#allocation3] sm:$0xff]
          %433 = vadd.xlane.f32.xlu0 %v432
          %v434 = vpop.xlane.xlu0 %433
          %v435 = vrot.slane %v434, 4
          %v436 = vadd.f32 %v434, %v435
          %v437 = vrot.slane %v436, 2
          %v438 = vadd.f32 %v436, %v437
          %v439 = vrot.slane %v438, 1
          %v440 = vadd.f32 %v438, %v439
          %s441 = vtos %v440
          %s442 = smul.f32 %s441, -0.020833334
          %s443 = scalar_lea.smem [#allocation14], 0
          %444 = sst [smem:[%s443]] %s442
        $region68: #{tpu_custom_call.1} parent=35 // pred_fallthru
          _
        // Predicated region
        $region69: #{tpu_custom_call.1} parent=35 // pred_check
          %p445 = pneg %p153
        $region70: #{tpu_custom_call.1} parent=35 // pred_check_branch
          %447 = sbr.rel (%p445) target = $region72
        $region71: #{tpu_custom_call.1} parent=35 // pred_region
          %s449 = ssub.s32 16, 16
          %450 = vsyncadd [#allocation8], %s449
          %453 = dma.smem_to_hbm [#allocation14], 16, %s4, [#allocation8]
        $region72: #{tpu_custom_call.1} parent=35 // pred_fallthru
          _
        // Predicated region
        $region73: #{tpu_custom_call.1} parent=35 // pred_check
          %p454 = pneg %p174
        $region74: #{tpu_custom_call.1} parent=35 // pred_check_branch
          %456 = sbr.rel (%p454) target = $region76
        $region75: #{tpu_custom_call.1} parent=35 // pred_region
          %s458 = ssub.s32 16, 16
          %459 = vsyncadd [#allocation7], %s458
          %s461 = sshll.u32 [#allocation15], 4
          %s462 = int_to_ptr.vmem [resolvable:$true] %s461
          %464 = dma.vmem_to_hbm [thread:$0]  %s462, 16, %s5, [#allocation7]
        $region76: #{tpu_custom_call.1} parent=35 // pred_fallthru
          _
        // Predicated region
        $region77: #{tpu_custom_call.1} parent=35 // pred_check
          %p465 = pneg %p153
        $region78: #{tpu_custom_call.1} parent=35 // pred_check_branch
          %467 = sbr.rel (%p465) target = $region80
        $region79: #{tpu_custom_call.1} parent=35 // pred_region
          %468 = dma.done [#allocation8], 16
        $region80: #{tpu_custom_call.1} parent=35 // pred_fallthru
          _
        // Predicated region
        $region81: #{tpu_custom_call.1} parent=35 // pred_check
          %p469 = pneg %p174
        $region82: #{tpu_custom_call.1} parent=35 // pred_check_branch
          %471 = sbr.rel (%p469) target = $region84
        $region83: #{tpu_custom_call.1} parent=35 // pred_region
          %472 = dma.done [#allocation7], 16
        $region84: #{tpu_custom_call.1} parent=35 // pred_fallthru
          _
        %473 = sfence
      $region36: #{tpu_custom_call.1} parent=5 // pred_fallthru
        _
      %p474 = scmp.le.s32.totalorder 2, %s21
      // Predicated region
      $region85: #{tpu_custom_call.1} parent=5 // pred_check
        %p475 = pneg %p474
      $region86: #{tpu_custom_call.1} parent=5 // pred_check_branch
        %477 = sbr.rel (%p475) target = $region88
      $region87: #{tpu_custom_call.1} parent=5 // pred_region
        %s478 = ssub.s32 %s21, 2
      $region88: #{tpu_custom_call.1} parent=5 // pred_fallthru
        _
    $region6: #{tpu_custom_call.1} parent=1 // loop_footer
      %s25 = sadd.s32 1, %s21
    $region7: #{tpu_custom_call.1} parent=1 // loop_footer_branch
      %20 = sbr.rel target = $region3
    $region8: #{tpu_custom_call.1} parent=1 // loop_exit
      _
    %479 = vsyncpa [#allocation6], 1
    %s480 = scalar_lea.sflag [#allocation6], 1
    %481 = vsyncpa %s480, 1
    %482 = vsyncpa [#allocation12], 1
    %s483 = scalar_lea.sflag [#allocation12], 1
    %484 = vsyncpa %s483, 1
    %485 = vsyncpa [#allocation7], 1
    %s486 = scalar_lea.sflag [#allocation7], 1
    %487 = vsyncpa %s486, 1
    %488 = vsyncpa [#allocation8], 1
    %s489 = scalar_lea.sflag [#allocation8], 1
    %490 = vsyncpa %s489, 1
    %491 = vsyncpa [#allocation9], 1
    %s492 = scalar_lea.sflag [#allocation9], 1
    %493 = vsyncpa %s492, 1

</llo_original>
